<compile_context>
chip_gen: v7x
topology: tpu7x:2x2x1
jax: 0.10.0
libtpu: 0.0.40
codegen_flags: <defaults>
</compile_context>

<pallas_src>
import functools

import jax
import jax.numpy as jnp
from jax.experimental import pallas as pl
from jax.experimental.pallas import tpu as pltpu

LN_EPS = 1e-5  # PyTorch nn.LayerNorm default


def _round_up(n, m):
    return ((n + m - 1) // m) * m


def _layernorm(h, gamma, beta):
    # One-pass statistics: mean and E[x^2] have no serial dependency, so both
    # cross-lane reductions can be issued together.  Biased variance + eps
    # inside rsqrt matches torch.nn.LayerNorm.
    mean = jnp.mean(h, axis=-1, keepdims=True)
    mean_sq = jnp.mean(h * h, axis=-1, keepdims=True)
    var = mean_sq - mean * mean
    inv = jax.lax.rsqrt(var + LN_EPS)
    return (h - mean) * inv * gamma + beta


def critic_kernel(
    s_ref, a_ref,
    w1s_ref, w1a_ref, b1_ref, g1_ref, be1_ref,
    w2_ref, b2_ref, g2_ref, be2_ref,
    w3_ref, b3_ref,
    o_ref,
):
    # --- fc1 on the split concat: cat([s,a]) @ W1 == s @ W1[:S] + a @ W1[S:]
    s = s_ref[...].astype(jnp.bfloat16)
    a = a_ref[...].astype(jnp.bfloat16)
    h1 = (
        jnp.dot(s, w1s_ref[...], preferred_element_type=jnp.float32)
        + jnp.dot(a, w1a_ref[...], preferred_element_type=jnp.float32)
        + b1_ref[...]
    )
    h1 = jnp.maximum(_layernorm(h1, g1_ref[...], be1_ref[...]), 0.0)

    # --- fc2 -> LayerNorm -> ReLU ---------------------------------------
    h2 = (
        jnp.dot(h1.astype(jnp.bfloat16), w2_ref[...],
                preferred_element_type=jnp.float32)
        + b2_ref[...]
    )
    h2 = jnp.maximum(_layernorm(h2, g2_ref[...], be2_ref[...]), 0.0)

    # --- fc3 --------------------------------------------------------------
    out = (
        jnp.dot(h2.astype(jnp.bfloat16), w3_ref[...],
                preferred_element_type=jnp.float32)
        + b3_ref[...]
    )
    o_ref[...] = out.astype(o_ref.dtype)


@functools.partial(jax.jit, static_argnames=("tile_b",))
def critic_forward(state, action, kparams, tile_b=512):
    """state: (B, S) f32, action: (B, A) f32, kparams: see prepare_kernel_params."""
    B, S = state.shape
    A = action.shape[1]

    # Batch tile: multiple of 8, capped so resident VMEM stays far below the
    # v7x 64 MiB / v5e 16 MiB-scoped ceilings (TB=512 -> ~1.3 MiB of activations).
    tb = min(tile_b, _round_up(B, 8))
    b_padded = _round_up(B, tb)
    if b_padded != B:
        pad = b_padded - B
        state = jnp.pad(state, ((0, pad), (0, 0)))
        action = jnp.pad(action, ((0, pad), (0, 0)))

    grid = (b_padded // tb,)

    def row_spec(feat):
        # Batch-tiled operand: new block per grid step (double-buffered DMA).
        return pl.BlockSpec((tb, feat), lambda i: (i, 0))

    def resident(arr):
        # Weight / bias / LN param: same block every step -> stays in VMEM.
        return pl.BlockSpec(arr.shape, lambda i: (0, 0))

    ins = (
        state, action,
        kparams["w1s"], kparams["w1a"], kparams["b1"], kparams["g1"], kparams["be1"],
        kparams["w2"], kparams["b2"], kparams["g2"], kparams["be2"],
        kparams["w3"], kparams["b3"],
    )
    in_specs = [
        row_spec(S), row_spec(A),
        resident(kparams["w1s"]), resident(kparams["w1a"]),
        resident(kparams["b1"]), resident(kparams["g1"]), resident(kparams["be1"]),
        resident(kparams["w2"]), resident(kparams["b2"]),
        resident(kparams["g2"]), resident(kparams["be2"]),
        resident(kparams["w3"]), resident(kparams["b3"]),
    ]

    out = pl.pallas_call(
        critic_kernel,
        out_shape=jax.ShapeDtypeStruct((b_padded, 1), jnp.float32),
        grid=grid,
        in_specs=in_specs,
        out_specs=pl.BlockSpec((tb, 1), lambda i: (i, 0)),
        compiler_params=pltpu.CompilerParams(
            dimension_semantics=("parallel",),          # megacore on v7x
            vmem_limit_bytes=32 * 1024 * 1024,          # safe on v5e/v6e/v7x
        ),
    )(*ins)
    return out[:B]


def init_params(key, state_size, action_size):
    """f32 params mimicking PyTorch default Linear init U(-k, k), k=1/sqrt(fan_in)."""
    dims = [(state_size + action_size, 256), (256, 128), (128, 1)]
    params = {}
    for i, (fan_in, fan_out) in enumerate(dims, start=1):
        key, kw, kb = jax.random.split(key, 3)
        bound = 1.0 / jnp.sqrt(jnp.array(fan_in, jnp.float32))
        params[f"w{i}"] = jax.random.uniform(
            kw, (fan_in, fan_out), jnp.float32, -bound, bound
        )
        params[f"b{i}"] = jax.random.uniform(
            kb, (1, fan_out), jnp.float32, -bound, bound
        )
    # LayerNorm affine params (PyTorch default: gamma=1, beta=0)
    params["g1"] = jnp.ones((1, 256), jnp.float32)
    params["be1"] = jnp.zeros((1, 256), jnp.float32)
    params["g2"] = jnp.ones((1, 128), jnp.float32)
    params["be2"] = jnp.zeros((1, 128), jnp.float32)
    return params


def prepare_kernel_params(params, state_size):
    """Split w1 into state/action halves and cast matmul weights to bf16 ONCE."""
    return {
        "w1s": params["w1"][:state_size].astype(jnp.bfloat16),
        "w1a": params["w1"][state_size:].astype(jnp.bfloat16),
        "b1": params["b1"], "g1": params["g1"], "be1": params["be1"],
        "w2": params["w2"].astype(jnp.bfloat16),
        "b2": params["b2"], "g2": params["g2"], "be2": params["be2"],
        "w3": params["w3"].astype(jnp.bfloat16),
        "b3": params["b3"],
    }


def _layernorm_ref(h, gamma, beta):
    mean = jnp.mean(h, axis=-1, keepdims=True)
    c = h - mean
    var = jnp.mean(c * c, axis=-1, keepdims=True)
    return c * jax.lax.rsqrt(var + LN_EPS) * gamma + beta


def reference_forward(state, action, params):
    """Pure-JAX f32 reference (matches the PyTorch module)."""
    x = jnp.concatenate([state, action], axis=1)
    h = jnp.maximum(_layernorm_ref(x @ params["w1"] + params["b1"],
                                   params["g1"], params["be1"]), 0.0)
    h = jnp.maximum(_layernorm_ref(h @ params["w2"] + params["b2"],
                                   params["g2"], params["be2"]), 0.0)
    return h @ params["w3"] + params["b3"]


if __name__ == "__main__":
    state_size, action_size = 16, 8

    key = jax.random.PRNGKey(0)
    kp, kdata = jax.random.split(key)

    params = init_params(kp, state_size, action_size)
    kparams = prepare_kernel_params(params, state_size)

    # Small shape (required) + a multi-tile batch with a padded tail.
    for batch in (8, 1040):
        ks, ka = jax.random.split(jax.random.fold_in(kdata, batch))
        state = jax.random.normal(ks, (batch, state_size), jnp.float32)
        action = jax.random.normal(ka, (batch, action_size), jnp.float32)

        out = critic_forward(state, action, kparams)
        jax.block_until_ready(out)

        ref = reference_forward(state, action, params)
        assert out.shape == (batch, 1)
        max_err = float(jnp.max(jnp.abs(out - ref)))
        # bf16 MXU operands (f32 accumulation) vs f32 reference.
        assert max_err < 5e-2, f"mismatch vs JAX reference: max abs err {max_err}"

    print("KERNEL_OK")
</pallas_src>

<mosaic_0001>
module attributes {stable_mosaic.version = 11 : i64} {
  func.func @critic_kernel(%arg0: i32, %arg1: memref<8x16xf32, #tpu.memory_space<vmem>>, %arg2: memref<8x8xf32, #tpu.memory_space<vmem>>, %arg3: memref<16x256xbf16, #tpu.memory_space<vmem>>, %arg4: memref<8x256xbf16, #tpu.memory_space<vmem>>, %arg5: memref<1x256xf32, #tpu.memory_space<vmem>>, %arg6: memref<1x256xf32, #tpu.memory_space<vmem>>, %arg7: memref<1x256xf32, #tpu.memory_space<vmem>>, %arg8: memref<256x128xbf16, #tpu.memory_space<vmem>>, %arg9: memref<1x128xf32, #tpu.memory_space<vmem>>, %arg10: memref<1x128xf32, #tpu.memory_space<vmem>>, %arg11: memref<1x128xf32, #tpu.memory_space<vmem>>, %arg12: memref<128x1xbf16, #tpu.memory_space<vmem>>, %arg13: memref<1x1xf32, #tpu.memory_space<vmem>>, %arg14: memref<8x1xf32, #tpu.memory_space<vmem>>) attributes {dimension_semantics = [#tpu.dimension_semantics<parallel>], iteration_bounds = array<i64: 1>, scalar_prefetch = 0 : i64, scratch_operands = 0 : i64, tpu.core_type = #tpu.core_type<tc>, window_params = [{transform_indices = @transform_0, window_bounds = array<i64: 8, 16>}, {transform_indices = @transform_1, window_bounds = array<i64: 8, 8>}, {pipeline_mode = #tpu.pipeline_mode<synchronous>, transform_indices = @transform_2, window_bounds = array<i64: 16, 256>}, {pipeline_mode = #tpu.pipeline_mode<synchronous>, transform_indices = @transform_3, window_bounds = array<i64: 8, 256>}, {pipeline_mode = #tpu.pipeline_mode<synchronous>, transform_indices = @transform_4, window_bounds = array<i64: 1, 256>}, {pipeline_mode = #tpu.pipeline_mode<synchronous>, transform_indices = @transform_5, window_bounds = array<i64: 1, 256>}, {pipeline_mode = #tpu.pipeline_mode<synchronous>, transform_indices = @transform_6, window_bounds = array<i64: 1, 256>}, {pipeline_mode = #tpu.pipeline_mode<synchronous>, transform_indices = @transform_7, window_bounds = array<i64: 256, 128>}, {pipeline_mode = #tpu.pipeline_mode<synchronous>, transform_indices = @transform_8, window_bounds = array<i64: 1, 128>}, {pipeline_mode = #tpu.pipeline_mode<synchronous>, transform_indices = @transform_9, window_bounds = array<i64: 1, 128>}, {pipeline_mode = #tpu.pipeline_mode<synchronous>, transform_indices = @transform_10, window_bounds = array<i64: 1, 128>}, {pipeline_mode = #tpu.pipeline_mode<synchronous>, transform_indices = @transform_11, window_bounds = array<i64: 128, 1>}, {pipeline_mode = #tpu.pipeline_mode<synchronous>, transform_indices = @transform_12, window_bounds = array<i64: 1, 1>}, {transform_indices = @transform_13, window_bounds = array<i64: 8, 1>}]} {
    %c0 = arith.constant 0 : index
    %c0_0 = arith.constant 0 : index
    %0 = vector.load %arg1[%c0, %c0_0] : memref<8x16xf32, #tpu.memory_space<vmem>>, vector<8x16xf32>
    %1 = arith.truncf %0 : vector<8x16xf32> to vector<8x16xbf16>
    %c0_1 = arith.constant 0 : index
    %c0_2 = arith.constant 0 : index
    %2 = vector.load %arg2[%c0_1, %c0_2] : memref<8x8xf32, #tpu.memory_space<vmem>>, vector<8x8xf32>
    %3 = arith.truncf %2 : vector<8x8xf32> to vector<8x8xbf16>
    %c0_3 = arith.constant 0 : index
    %c0_4 = arith.constant 0 : index
    %4 = vector.load %arg3[%c0_3, %c0_4] : memref<16x256xbf16, #tpu.memory_space<vmem>>, vector<16x256xbf16>
    %cst = arith.constant dense<0.000000e+00> : vector<8x256xf32>
    %5 = tpu.matmul %1, %4, %cst {dimension_numbers = #tpu.dot_dimension_numbers<[1], [0], [0], [1], [0, 0, 1, 1], [], []>} : vector<8x16xbf16>, vector<16x256xbf16>, vector<8x256xf32> -> vector<8x256xf32>
    %c0_5 = arith.constant 0 : index
    %c0_6 = arith.constant 0 : index
    %6 = vector.load %arg4[%c0_5, %c0_6] : memref<8x256xbf16, #tpu.memory_space<vmem>>, vector<8x256xbf16>
    %cst_7 = arith.constant dense<0.000000e+00> : vector<8x256xf32>
    %7 = tpu.matmul %3, %6, %cst_7 {dimension_numbers = #tpu.dot_dimension_numbers<[1], [0], [0], [1], [0, 0, 1, 1], [], []>} : vector<8x8xbf16>, vector<8x256xbf16>, vector<8x256xf32> -> vector<8x256xf32>
    %8 = arith.addf %5, %7 : vector<8x256xf32>
    %c0_8 = arith.constant 0 : index
    %c0_9 = arith.constant 0 : index
    %9 = vector.load %arg5[%c0_8, %c0_9] : memref<1x256xf32, #tpu.memory_space<vmem>>, vector<1x256xf32>
    %10 = vector.broadcast %9 : vector<1x256xf32> to vector<8x256xf32>
    %11 = arith.addf %8, %10 : vector<8x256xf32>
    %c0_10 = arith.constant 0 : index
    %c0_11 = arith.constant 0 : index
    %12 = vector.load %arg6[%c0_10, %c0_11] : memref<1x256xf32, #tpu.memory_space<vmem>>, vector<1x256xf32>
    %c0_12 = arith.constant 0 : index
    %c0_13 = arith.constant 0 : index
    %13 = vector.load %arg7[%c0_12, %c0_13] : memref<1x256xf32, #tpu.memory_space<vmem>>, vector<1x256xf32>
    %cst_14 = arith.constant dense<0.000000e+00> : vector<8xf32>
    %14 = vector.multi_reduction <add>, %11, %cst_14 [1] : vector<8x256xf32> to vector<8xf32>
    %15 = vector.shape_cast %14 : vector<8xf32> to vector<8x1xf32>
    %cst_15 = arith.constant 2.560000e+02 : f32
    %16 = vector.broadcast %cst_15 : f32 to vector<8x1xf32>
    %17 = arith.divf %15, %16 : vector<8x1xf32>
    %18 = arith.mulf %11, %11 : vector<8x256xf32>
    %cst_16 = arith.constant dense<0.000000e+00> : vector<8xf32>
    %19 = vector.multi_reduction <add>, %18, %cst_16 [1] : vector<8x256xf32> to vector<8xf32>
    %20 = vector.shape_cast %19 : vector<8xf32> to vector<8x1xf32>
    %cst_17 = arith.constant 2.560000e+02 : f32
    %21 = vector.broadcast %cst_17 : f32 to vector<8x1xf32>
    %22 = arith.divf %20, %21 : vector<8x1xf32>
    %23 = arith.mulf %17, %17 : vector<8x1xf32>
    %24 = arith.subf %22, %23 : vector<8x1xf32>
    %cst_18 = arith.constant 9.99999974E-6 : f32
    %25 = vector.broadcast %cst_18 : f32 to vector<8x1xf32>
    %26 = arith.addf %24, %25 : vector<8x1xf32>
    %27 = math.rsqrt %26 : vector<8x1xf32>
    %28 = vector.broadcast %17 : vector<8x1xf32> to vector<8x256xf32>
    %29 = arith.subf %11, %28 : vector<8x256xf32>
    %30 = vector.broadcast %27 : vector<8x1xf32> to vector<8x256xf32>
    %31 = arith.mulf %29, %30 : vector<8x256xf32>
    %32 = vector.broadcast %12 : vector<1x256xf32> to vector<8x256xf32>
    %33 = arith.mulf %31, %32 : vector<8x256xf32>
    %34 = vector.broadcast %13 : vector<1x256xf32> to vector<8x256xf32>
    %35 = arith.addf %33, %34 : vector<8x256xf32>
    %cst_19 = arith.constant 0.000000e+00 : f32
    %36 = vector.broadcast %cst_19 : f32 to vector<8x256xf32>
    %37 = arith.maximumf %35, %36 : vector<8x256xf32>
    %38 = arith.truncf %37 : vector<8x256xf32> to vector<8x256xbf16>
    %c0_20 = arith.constant 0 : index
    %c0_21 = arith.constant 0 : index
    %39 = vector.load %arg8[%c0_20, %c0_21] : memref<256x128xbf16, #tpu.memory_space<vmem>>, vector<256x128xbf16>
    %cst_22 = arith.constant dense<0.000000e+00> : vector<8x128xf32>
    %40 = tpu.matmul %38, %39, %cst_22 {dimension_numbers = #tpu.dot_dimension_numbers<[1], [0], [0], [1], [0, 0, 1, 1], [], []>} : vector<8x256xbf16>, vector<256x128xbf16>, vector<8x128xf32> -> vector<8x128xf32>
    %c0_23 = arith.constant 0 : index
    %c0_24 = arith.constant 0 : index
    %41 = vector.load %arg9[%c0_23, %c0_24] : memref<1x128xf32, #tpu.memory_space<vmem>>, vector<1x128xf32>
    %42 = vector.broadcast %41 : vector<1x128xf32> to vector<8x128xf32>
    %43 = arith.addf %40, %42 : vector<8x128xf32>
    %c0_25 = arith.constant 0 : index
    %c0_26 = arith.constant 0 : index
    %44 = vector.load %arg10[%c0_25, %c0_26] : memref<1x128xf32, #tpu.memory_space<vmem>>, vector<1x128xf32>
    %c0_27 = arith.constant 0 : index
    %c0_28 = arith.constant 0 : index
    %45 = vector.load %arg11[%c0_27, %c0_28] : memref<1x128xf32, #tpu.memory_space<vmem>>, vector<1x128xf32>
    %cst_29 = arith.constant dense<0.000000e+00> : vector<8xf32>
    %46 = vector.multi_reduction <add>, %43, %cst_29 [1] : vector<8x128xf32> to vector<8xf32>
    %47 = vector.shape_cast %46 : vector<8xf32> to vector<8x1xf32>
    %cst_30 = arith.constant 1.280000e+02 : f32
    %48 = vector.broadcast %cst_30 : f32 to vector<8x1xf32>
    %49 = arith.divf %47, %48 : vector<8x1xf32>
    %50 = arith.mulf %43, %43 : vector<8x128xf32>
    %cst_31 = arith.constant dense<0.000000e+00> : vector<8xf32>
    %51 = vector.multi_reduction <add>, %50, %cst_31 [1] : vector<8x128xf32> to vector<8xf32>
    %52 = vector.shape_cast %51 : vector<8xf32> to vector<8x1xf32>
    %cst_32 = arith.constant 1.280000e+02 : f32
    %53 = vector.broadcast %cst_32 : f32 to vector<8x1xf32>
    %54 = arith.divf %52, %53 : vector<8x1xf32>
    %55 = arith.mulf %49, %49 : vector<8x1xf32>
    %56 = arith.subf %54, %55 : vector<8x1xf32>
    %cst_33 = arith.constant 9.99999974E-6 : f32
    %57 = vector.broadcast %cst_33 : f32 to vector<8x1xf32>
    %58 = arith.addf %56, %57 : vector<8x1xf32>
    %59 = math.rsqrt %58 : vector<8x1xf32>
    %60 = vector.broadcast %49 : vector<8x1xf32> to vector<8x128xf32>
    %61 = arith.subf %43, %60 : vector<8x128xf32>
    %62 = vector.broadcast %59 : vector<8x1xf32> to vector<8x128xf32>
    %63 = arith.mulf %61, %62 : vector<8x128xf32>
    %64 = vector.broadcast %44 : vector<1x128xf32> to vector<8x128xf32>
    %65 = arith.mulf %63, %64 : vector<8x128xf32>
    %66 = vector.broadcast %45 : vector<1x128xf32> to vector<8x128xf32>
    %67 = arith.addf %65, %66 : vector<8x128xf32>
    %cst_34 = arith.constant 0.000000e+00 : f32
    %68 = vector.broadcast %cst_34 : f32 to vector<8x128xf32>
    %69 = arith.maximumf %67, %68 : vector<8x128xf32>
    %70 = arith.truncf %69 : vector<8x128xf32> to vector<8x128xbf16>
    %c0_35 = arith.constant 0 : index
    %c0_36 = arith.constant 0 : index
    %71 = vector.load %arg12[%c0_35, %c0_36] : memref<128x1xbf16, #tpu.memory_space<vmem>>, vector<128x1xbf16>
    %cst_37 = arith.constant dense<0.000000e+00> : vector<8x1xf32>
    %72 = tpu.matmul %70, %71, %cst_37 {dimension_numbers = #tpu.dot_dimension_numbers<[1], [0], [0], [1], [0, 0, 1, 1], [], []>} : vector<8x128xbf16>, vector<128x1xbf16>, vector<8x1xf32> -> vector<8x1xf32>
    %c0_38 = arith.constant 0 : index
    %c0_39 = arith.constant 0 : index
    %73 = vector.load %arg13[%c0_38, %c0_39] : memref<1x1xf32, #tpu.memory_space<vmem>>, vector<1x1xf32>
    %74 = vector.broadcast %73 : vector<1x1xf32> to vector<8x1xf32>
    %75 = arith.addf %72, %74 : vector<8x1xf32>
    %c0_40 = arith.constant 0 : index
    %c0_41 = arith.constant 0 : index
    %76 = vector.load %arg14[%c0_40, %c0_41] : memref<8x1xf32, #tpu.memory_space<vmem>>, vector<8x1xf32>
    tpu.vector_store %arg14[%c0_40, %c0_41], %75 {strides = array<i32>} : memref<8x1xf32, #tpu.memory_space<vmem>>, vector<8x1xf32>,
    return
  }
  func.func @transform_0(%arg0: i32) -> (i32, i32) {
    %c0_i32 = arith.constant 0 : i32
    %c0_i32_0 = arith.constant 0 : i32
    return %arg0, %c0_i32 : i32, i32
  }
  func.func @transform_1(%arg0: i32) -> (i32, i32) {
    %c0_i32 = arith.constant 0 : i32
    %c0_i32_0 = arith.constant 0 : i32
    return %arg0, %c0_i32 : i32, i32
  }
  func.func @transform_2(%arg0: i32) -> (i32, i32) {
    %c0_i32 = arith.constant 0 : i32
    %c0_i32_0 = arith.constant 0 : i32
    %c0_i32_1 = arith.constant 0 : i32
    return %c0_i32, %c0_i32_0 : i32, i32
  }
  func.func @transform_3(%arg0: i32) -> (i32, i32) {
    %c0_i32 = arith.constant 0 : i32
    %c0_i32_0 = arith.constant 0 : i32
    %c0_i32_1 = arith.constant 0 : i32
    return %c0_i32, %c0_i32_0 : i32, i32
  }
  func.func @transform_4(%arg0: i32) -> (i32, i32) {
    %c0_i32 = arith.constant 0 : i32
    %c0_i32_0 = arith.constant 0 : i32
    %c0_i32_1 = arith.constant 0 : i32
    return %c0_i32, %c0_i32_0 : i32, i32
  }
  func.func @transform_5(%arg0: i32) -> (i32, i32) {
    %c0_i32 = arith.constant 0 : i32
    %c0_i32_0 = arith.constant 0 : i32
    %c0_i32_1 = arith.constant 0 : i32
    return %c0_i32, %c0_i32_0 : i32, i32
  }
  func.func @transform_6(%arg0: i32) -> (i32, i32) {
    %c0_i32 = arith.constant 0 : i32
    %c0_i32_0 = arith.constant 0 : i32
    %c0_i32_1 = arith.constant 0 : i32
    return %c0_i32, %c0_i32_0 : i32, i32
  }
  func.func @transform_7(%arg0: i32) -> (i32, i32) {
    %c0_i32 = arith.constant 0 : i32
    %c0_i32_0 = arith.constant 0 : i32
    %c0_i32_1 = arith.constant 0 : i32
    return %c0_i32, %c0_i32_0 : i32, i32
  }
  func.func @transform_8(%arg0: i32) -> (i32, i32) {
    %c0_i32 = arith.constant 0 : i32
    %c0_i32_0 = arith.constant 0 : i32
    %c0_i32_1 = arith.constant 0 : i32
    return %c0_i32, %c0_i32_0 : i32, i32
  }
  func.func @transform_9(%arg0: i32) -> (i32, i32) {
    %c0_i32 = arith.constant 0 : i32
    %c0_i32_0 = arith.constant 0 : i32
    %c0_i32_1 = arith.constant 0 : i32
    return %c0_i32, %c0_i32_0 : i32, i32
  }
  func.func @transform_10(%arg0: i32) -> (i32, i32) {
    %c0_i32 = arith.constant 0 : i32
    %c0_i32_0 = arith.constant 0 : i32
    %c0_i32_1 = arith.constant 0 : i32
    return %c0_i32, %c0_i32_0 : i32, i32
  }
  func.func @transform_11(%arg0: i32) -> (i32, i32) {
    %c0_i32 = arith.constant 0 : i32
    %c0_i32_0 = arith.constant 0 : i32
    %c0_i32_1 = arith.constant 0 : i32
    return %c0_i32, %c0_i32_0 : i32, i32
  }
  func.func @transform_12(%arg0: i32) -> (i32, i32) {
    %c0_i32 = arith.constant 0 : i32
    %c0_i32_0 = arith.constant 0 : i32
    %c0_i32_1 = arith.constant 0 : i32
    return %c0_i32, %c0_i32_0 : i32, i32
  }
  func.func @transform_13(%arg0: i32) -> (i32, i32) {
    %c0_i32 = arith.constant 0 : i32
    %c0_i32_0 = arith.constant 0 : i32
    return %arg0, %c0_i32 : i32, i32
  }
}

</mosaic_0001>

<llo_original>
// kernel: critic_forward.1
$region0: #{critic_forward.1}
  #allocation0 [shape = 'u32[]', space=smem, size = 0x4, offset = 0x4, fixed_abs, tag = 'smem constant byte address 0x4 - core index']
  #allocation1 [shape = 'u32[144,128]{1,0:T(1,128)}', space=vmem, size = 0x12000, scoped, tag = 'internal scratch']
  #allocation2 [shape = 'f32[1,1]{1,0:T(1,128)S(1)}', space=vmem, size = 0x200, scoped, tag = 'scoped memory for critic_forward.1']
  %s0 = inlined_call_operand.vmem [shape: f32[8,16], index: 0, kind: input, shape index: {}]
  %s1 = inlined_call_operand.vmem [shape: f32[8,8], index: 1, kind: input, shape index: {}]
  %s2 = inlined_call_operand.vmem [shape: bf16[16,256], index: 2, kind: input, shape index: {}]
  %s3 = inlined_call_operand.vmem [shape: bf16[8,256], index: 3, kind: input, shape index: {}]
  %s4 = inlined_call_operand.vmem [shape: f32[1,256], index: 4, kind: input, shape index: {}]
  %s5 = inlined_call_operand.vmem [shape: f32[1,256], index: 5, kind: input, shape index: {}]
  %s6 = inlined_call_operand.vmem [shape: f32[1,256], index: 6, kind: input, shape index: {}]
  %s7 = inlined_call_operand.hbm [shape: bf16[256,128], index: 7, kind: input, shape index: {}]
  %s8 = inlined_call_operand.vmem [shape: f32[1,128], index: 8, kind: input, shape index: {}]
  %s9 = inlined_call_operand.vmem [shape: f32[1,128], index: 9, kind: input, shape index: {}]
  %s10 = inlined_call_operand.vmem [shape: f32[1,128], index: 10, kind: input, shape index: {}]
  %s11 = inlined_call_operand.vmem [shape: bf16[128,1], index: 11, kind: input, shape index: {}]
  %s12 = inlined_call_operand.<no memory space> [shape: f32[1,1], index: 12, kind: input, shape index: {}]
  %s13 = inlined_call_operand.vmem [shape: f32[8,1], index: 13, kind: output, shape index: {}]
  %s14 = sld [smem:[#allocation0]]
  $region66: #{critic_forward.1} parent=0
    _
  %s16 = ssub.s32 1, %s14
  %s17 = scalar_select 0, %s16, %s14
  %v18 = vstv %s12
  %19 = vst [vmem:[#allocation2] sm:$0x1] %v18
  $region1: #{critic_forward.1} parent=0
    #allocation3 [shape = 'u8[65536]{0}', space=vmem, size = 0x10000, scoped, tag = 'input window, operand 7, single buffered']
    #allocation4 [shape = 's32[1]{0}', space=sflag, size = 0x4, scoped, tag = 'scoped memory for critic_forward.1']
    %20 = vsyncpa [#allocation4], 0
    // Predicated region
    $region2: #{critic_forward.1} parent=1 // pred_check
      _
    $region3: #{critic_forward.1} parent=1 // pred_check_branch
      %22 = sbr.rel (0) target = $region5
    $region4: #{critic_forward.1} parent=1 // pred_region
      _
    $region5: #{critic_forward.1} parent=1 // pred_fallthru
      _
    // Predicated region
    $region6: #{critic_forward.1} parent=1 // pred_check
      _
    $region7: #{critic_forward.1} parent=1 // pred_check_branch
      %24 = sbr.rel (0) target = $region9
    $region8: #{critic_forward.1} parent=1 // pred_region
      _
    $region9: #{critic_forward.1} parent=1 // pred_fallthru
      _
    // Predicated region
    $region10: #{critic_forward.1} parent=1 // pred_check
      _
    $region11: #{critic_forward.1} parent=1 // pred_check_branch
      %26 = sbr.rel (0) target = $region13
    $region12: #{critic_forward.1} parent=1 // pred_region
      _
    $region13: #{critic_forward.1} parent=1 // pred_fallthru
      _
    // Predicated region
    $region14: #{critic_forward.1} parent=1 // pred_check
      _
    $region15: #{critic_forward.1} parent=1 // pred_check_branch
      %28 = sbr.rel (0) target = $region17
    $region16: #{critic_forward.1} parent=1 // pred_region
      _
    $region17: #{critic_forward.1} parent=1 // pred_fallthru
      _
    // Predicated region
    $region18: #{critic_forward.1} parent=1 // pred_check
      _
    $region19: #{critic_forward.1} parent=1 // pred_check_branch
      %30 = sbr.rel (0) target = $region21
    $region20: #{critic_forward.1} parent=1 // pred_region
      _
    $region21: #{critic_forward.1} parent=1 // pred_fallthru
      _
    // Predicated region
    $region22: #{critic_forward.1} parent=1 // pred_check
      _
    $region23: #{critic_forward.1} parent=1 // pred_check_branch
      %32 = sbr.rel (0) target = $region25
    $region24: #{critic_forward.1} parent=1 // pred_region
      _
    $region25: #{critic_forward.1} parent=1 // pred_fallthru
      _
    // Predicated region
    $region26: #{critic_forward.1} parent=1 // pred_check
      _
    $region27: #{critic_forward.1} parent=1 // pred_check_branch
      %34 = sbr.rel (0) target = $region29
    $region28: #{critic_forward.1} parent=1 // pred_region
      _
    $region29: #{critic_forward.1} parent=1 // pred_fallthru
      _
    // Predicated region
    $region30: #{critic_forward.1} parent=1 // pred_check
      _
    $region31: #{critic_forward.1} parent=1 // pred_check_branch
      %36 = sbr.rel (0) target = $region33
    $region32: #{critic_forward.1} parent=1 // pred_region
      %s38 = ssub.s32 2048, 2048
      %39 = vsyncadd [#allocation4], %s38
      %s40 = sshll.u32 [#allocation3], 4
      %s41 = int_to_ptr.vmem [resolvable:$true] %s40
      %46 = dma.hbm_to_vmem [thread:$0]  %s7, 2048, %s41, [#allocation4], 64, 64, 4
    $region33: #{critic_forward.1} parent=1 // pred_fallthru
      _
    // Predicated region
    $region34: #{critic_forward.1} parent=1 // pred_check
      _
    $region35: #{critic_forward.1} parent=1 // pred_check_branch
      %48 = sbr.rel (0) target = $region37
    $region36: #{critic_forward.1} parent=1 // pred_region
      _
    $region37: #{critic_forward.1} parent=1 // pred_fallthru
      _
    // Predicated region
    $region38: #{critic_forward.1} parent=1 // pred_check
      _
    $region39: #{critic_forward.1} parent=1 // pred_check_branch
      %50 = sbr.rel (0) target = $region41
    $region40: #{critic_forward.1} parent=1 // pred_region
      _
    $region41: #{critic_forward.1} parent=1 // pred_fallthru
      _
    // Predicated region
    $region42: #{critic_forward.1} parent=1 // pred_check
      _
    $region43: #{critic_forward.1} parent=1 // pred_check_branch
      %52 = sbr.rel (0) target = $region45
    $region44: #{critic_forward.1} parent=1 // pred_region
      _
    $region45: #{critic_forward.1} parent=1 // pred_fallthru
      _
    // Predicated region
    $region46: #{critic_forward.1} parent=1 // pred_check
      _
    $region47: #{critic_forward.1} parent=1 // pred_check_branch
      %54 = sbr.rel (0) target = $region49
    $region48: #{critic_forward.1} parent=1 // pred_region
      _
    $region49: #{critic_forward.1} parent=1 // pred_fallthru
      _
    // Predicated region
    $region50: #{critic_forward.1} parent=1 // pred_check
      _
    $region51: #{critic_forward.1} parent=1 // pred_check_branch
      %56 = sbr.rel (0) target = $region53
    $region52: #{critic_forward.1} parent=1 // pred_region
      _
    $region53: #{critic_forward.1} parent=1 // pred_fallthru
      _
    // Predicated region
    $region54: #{critic_forward.1} parent=1 // pred_check
      _
    $region55: #{critic_forward.1} parent=1 // pred_check_branch
      %58 = sbr.rel (0) target = $region57
    $region56: #{critic_forward.1} parent=1 // pred_region
      %59 = dma.done [#allocation4], 2048
    $region57: #{critic_forward.1} parent=1 // pred_fallthru
      _
    %v61 = vld [vmem:[%s0] sm:$0xff]
    %v62 = vpack.c.bf16 %v61, %v61
    %v63 = vld [vmem:[%s1] sm:$0xff]
    %v64 = vpack.c.bf16 %v63, %v63
    %v65 = vld [vmem:[%s2] sm:$0xff]
    %v66 = vld [vmem:[%s2 + $0x8] sm:$0xff]
    %v67 = vld [vmem:[%s3] sm:$0xff]
    %v69 = vunpack.c.l.b16 %v67
    %v70 = vunpack.c.h.b16 %v67
    %v71 = vpack.c.b16 %v69, %v69
    %v72 = vpack.c.b16 %v70, %v70
    %vm73 = vcmask 64512
    %v75 = vsel %vm73, %v64, 0
    %vm77 = vcmask 1043456
    %v79 = vsel %vm77, %v71, 0
    %v82 = vsel %vm77, %v72, 0
    %84 = vmatprep.subr.bf16.mxu0 %v82
    %85 = vmatpush1.bf16.msra.mxu0 %v79
    %86 = vmatprep.subr.bf16.mxu0 0
    %87 = vmatpush1.bf16.msra.mxu0 0
    %88 = vmatprep.subr.bf16.mxu0 0
    %89 = vmatpush1.bf16.msra.mxu0 0
    %90 = vmatprep.subr.bf16.mxu0 0
    %91 = vmatpush1.bf16.msra.mxu0 0
    %92 = vmatprep.subr.bf16.mxu0 0
    %93 = vmatpush1.bf16.msra.mxu0 0
    %94 = vmatprep.subr.bf16.mxu0 0
    %95 = vmatpush1.bf16.msra.mxu0 0
    %96 = vmatprep.subr.bf16.mxu0 0
    %97 = vmatpush1.bf16.msra.mxu0 0
    %98 = vmatprep.subr.bf16.mxu0 0
    %99 = vmatpush1.bf16.msra.mxu0 0
    %100 = vmatprep.subr.bf16.mxu0 0
    %101 = vmatpush1.bf16.msra.mxu0 0
    %102 = vmatprep.subr.bf16.mxu0 0
    %103 = vmatpush1.bf16.msra.mxu0 0
    %104 = vmatprep.subr.bf16.mxu0 0
    %105 = vmatpush1.bf16.msra.mxu0 0
    %106 = vmatprep.subr.bf16.mxu0 0
    %107 = vmatpush1.bf16.msra.mxu0 0
    %108 = vmatprep.subr.bf16.mxu0 0
    %109 = vmatpush1.bf16.msra.mxu0 0
    %110 = vmatprep.subr.bf16.mxu0 0
    %111 = vmatpush1.bf16.msra.mxu0 0
    %112 = vmatprep.subr.bf16.mxu0 0
    %113 = vmatpush1.bf16.msra.mxu0 0
    %114 = vmatprep.subr.bf16.mxu0 0
    %115 = vmatpush1.bf16.msra.mxu0 0
    %116 = vmatprep.mubr.bf16.mxu0 0
    %117 = vmatmul.mubr.bf16.gmra.mrb[0].mxu0 %v75
    %v118 = vpop.f32.mrb[0].mxu0
    %v119 = vadd.f32 0.0, %v118
    %v120 = vpop.f32.mrb[0].mxu0
    %v121 = vadd.f32 0.0, %v120
    %v122 = vpop.f32.mrb[0].mxu0
    %v123 = vpop.f32.mrb[0].mxu0
    %124 = vdwg.mxu0
    %v127 = vunpack.c.l.b16 %v65
    %v128 = vunpack.c.h.b16 %v65
    %v129 = vunpack.c.l.b16 %v66
    %v130 = vunpack.c.h.b16 %v66
    %v131 = vpack.c.b16 %v129, %v127
    %v132 = vpack.c.b16 %v130, %v128
    %vm135 = vcmask 130048
    %v137 = vsel %vm135, %v62, 0
    %139 = vmatprep.subr.bf16.mxu0 %v132
    %140 = vmatpush1.bf16.msra.mxu0 %v131
    %141 = vmatprep.subr.bf16.mxu0 0
    %142 = vmatpush1.bf16.msra.mxu0 0
    %143 = vmatprep.subr.bf16.mxu0 0
    %144 = vmatpush1.bf16.msra.mxu0 0
    %145 = vmatprep.subr.bf16.mxu0 0
    %146 = vmatpush1.bf16.msra.mxu0 0
    %147 = vmatprep.subr.bf16.mxu0 0
    %148 = vmatpush1.bf16.msra.mxu0 0
    %149 = vmatprep.subr.bf16.mxu0 0
    %150 = vmatpush1.bf16.msra.mxu0 0
    %151 = vmatprep.subr.bf16.mxu0 0
    %152 = vmatpush1.bf16.msra.mxu0 0
    %153 = vmatprep.subr.bf16.mxu0 0
    %154 = vmatpush1.bf16.msra.mxu0 0
    %155 = vmatprep.subr.bf16.mxu0 0
    %156 = vmatpush1.bf16.msra.mxu0 0
    %157 = vmatprep.subr.bf16.mxu0 0
    %158 = vmatpush1.bf16.msra.mxu0 0
    %159 = vmatprep.subr.bf16.mxu0 0
    %160 = vmatpush1.bf16.msra.mxu0 0
    %161 = vmatprep.subr.bf16.mxu0 0
    %162 = vmatpush1.bf16.msra.mxu0 0
    %163 = vmatprep.subr.bf16.mxu0 0
    %164 = vmatpush1.bf16.msra.mxu0 0
    %165 = vmatprep.subr.bf16.mxu0 0
    %166 = vmatpush1.bf16.msra.mxu0 0
    %167 = vmatprep.subr.bf16.mxu0 0
    %168 = vmatpush1.bf16.msra.mxu0 0
    %169 = vmatprep.subr.bf16.mxu0 0
    %170 = vmatpush1.bf16.msra.mxu0 0
    %171 = vmatprep.mubr.bf16.mxu0 0
    %172 = vmatmul.mubr.bf16.gmra.mrb[0].mxu0 %v137
    %v173 = vpop.f32.mrb[0].mxu0
    %v174 = vadd.f32 %v119, %v173
    %v175 = vpop.f32.mrb[0].mxu0
    %v176 = vadd.f32 %v121, %v175
    %v177 = vpop.f32.mrb[0].mxu0
    %v178 = vpop.f32.mrb[0].mxu0
    %179 = vdwg.mxu0
    %v180 = vld [vmem:[%s4] sm:$0x3]
    %v182 = vlaneseq
    %v183 = vshrl.u32 %v182, 7
    %v184 = vsub.s32 0, %v183
    %v185 = vrot.slane %v180, %v184
    %v186 = vlaneseq
    %v187 = vshrl.u32 %v186, 7
    %v188 = vsub.s32 1, %v187
    %v189 = vrot.slane %v180, %v188
    %v192 = vadd.f32 %v174, %v185
    %v193 = vadd.f32 %v176, %v189
    %v194 = vld [vmem:[%s5] sm:$0x3]
    %v195 = vld [vmem:[%s6] sm:$0x3]
    %v196 = vadd.f32 %v192, %v193
    %197 = vadd.xlane.f32.xlu0 %v196
    %v198 = vpop.xlane.xlu0 %197
    %v199 = vrcp.pop 256.0
    %v200 = vmul.f32 %v198, %v199
    %v201 = vmul.f32 %v192, %v192
    %v202 = vmul.f32 %v193, %v193
    %v203 = vadd.f32 %v201, %v202
    %204 = vadd.xlane.f32.xlu0 %v203
    %v205 = vpop.xlane.xlu0 %204
    %v206 = vmul.f32 %v205, %v199
    %v207 = vmul.f32 %v200, %v200
    %v208 = vsub.f32 %v206, %v207
    %v209 = vadd.f32 %v208, 1e-05
    %v210 = vrsqrt.pop %v209
    %v211 = vsub.f32 %v192, %v200
    %v212 = vsub.f32 %v193, %v200
    %v213 = vmul.f32 %v211, %v210
    %v214 = vmul.f32 %v212, %v210
    %v216 = vlaneseq
    %v217 = vshrl.u32 %v216, 7
    %v218 = vsub.s32 0, %v217
    %v219 = vrot.slane %v194, %v218
    %v220 = vlaneseq
    %v221 = vshrl.u32 %v220, 7
    %v222 = vsub.s32 1, %v221
    %v223 = vrot.slane %v194, %v222
    %v226 = vmul.f32 %v213, %v219
    %v227 = vmul.f32 %v214, %v223
    %v229 = vlaneseq
    %v230 = vshrl.u32 %v229, 7
    %v231 = vsub.s32 0, %v230
    %v232 = vrot.slane %v195, %v231
    %v233 = vlaneseq
    %v234 = vshrl.u32 %v233, 7
    %v235 = vsub.s32 1, %v234
    %v236 = vrot.slane %v195, %v235
    %v239 = vadd.f32 %v226, %v232
    %v240 = vadd.f32 %v227, %v236
    %v241 = vmax.f32 %v239, 0.0
    %v242 = vmax.f32 %v240, 0.0
    %v243 = vpack.c.bf16 %v241, %v241
    %v244 = vpack.c.bf16 %v242, %v242
    %v245 = vld [vmem:[#allocation3] sm:$0xf]
    %v246 = vld [vmem:[#allocation3 + $0x4] sm:$0xf]
    %v247 = vld [vmem:[#allocation3 + $0x8] sm:$0xf]
    %v248 = vld [vmem:[#allocation3 + $0xc] sm:$0xf]
    %v249 = vld [vmem:[#allocation3 + $0x10] sm:$0xf]
    %v250 = vld [vmem:[#allocation3 + $0x14] sm:$0xf]
    %v251 = vld [vmem:[#allocation3 + $0x18] sm:$0xf]
    %v252 = vld [vmem:[#allocation3 + $0x1c] sm:$0xf]
    %v253 = vld [vmem:[#allocation3 + $0x20] sm:$0xf]
    %v254 = vld [vmem:[#allocation3 + $0x24] sm:$0xf]
    %v255 = vld [vmem:[#allocation3 + $0x28] sm:$0xf]
    %v256 = vld [vmem:[#allocation3 + $0x2c] sm:$0xf]
    %v257 = vld [vmem:[#allocation3 + $0x30] sm:$0xf]
    %v258 = vld [vmem:[#allocation3 + $0x34] sm:$0xf]
    %v259 = vld [vmem:[#allocation3 + $0x38] sm:$0xf]
    %v260 = vld [vmem:[#allocation3 + $0x3c] sm:$0xf]
    %v261 = vld [vmem:[#allocation3 + $0x40] sm:$0xf]
    %v262 = vld [vmem:[#allocation3 + $0x44] sm:$0xf]
    %v263 = vld [vmem:[#allocation3 + $0x48] sm:$0xf]
    %v264 = vld [vmem:[#allocation3 + $0x4c] sm:$0xf]
    %v265 = vld [vmem:[#allocation3 + $0x50] sm:$0xf]
    %v266 = vld [vmem:[#allocation3 + $0x54] sm:$0xf]
    %v267 = vld [vmem:[#allocation3 + $0x58] sm:$0xf]
    %v268 = vld [vmem:[#allocation3 + $0x5c] sm:$0xf]
    %v269 = vld [vmem:[#allocation3 + $0x60] sm:$0xf]
    %v270 = vld [vmem:[#allocation3 + $0x64] sm:$0xf]
    %v271 = vld [vmem:[#allocation3 + $0x68] sm:$0xf]
    %v272 = vld [vmem:[#allocation3 + $0x6c] sm:$0xf]
    %v273 = vld [vmem:[#allocation3 + $0x70] sm:$0xf]
    %v274 = vld [vmem:[#allocation3 + $0x74] sm:$0xf]
    %v275 = vld [vmem:[#allocation3 + $0x78] sm:$0xf]
    %v276 = vld [vmem:[#allocation3 + $0x7c] sm:$0xf]
    %v277 = vld [vmem:[%s8] sm:$0x1]
    %v279 = vlaneseq
    %v280 = vshrl.u32 %v279, 7
    %v281 = vsub.s32 0, %v280
    %v282 = vrot.slane %v277, %v281
    %v316 = vunpack.c.l.b16 %v245
    %v317 = vunpack.c.l.b16 %v246
    %v318 = vunpack.c.l.b16 %v247
    %v319 = vunpack.c.l.b16 %v248
    %v320 = vunpack.c.l.b16 %v249
    %v321 = vunpack.c.l.b16 %v250
    %v322 = vunpack.c.l.b16 %v251
    %v323 = vunpack.c.l.b16 %v252
    %v324 = vunpack.c.l.b16 %v253
    %v325 = vunpack.c.l.b16 %v254
    %v326 = vunpack.c.l.b16 %v255
    %v327 = vunpack.c.l.b16 %v256
    %v328 = vunpack.c.l.b16 %v257
    %v329 = vunpack.c.l.b16 %v258
    %v330 = vunpack.c.l.b16 %v259
    %v331 = vunpack.c.l.b16 %v260
    %v332 = vunpack.c.l.b16 %v261
    %v333 = vunpack.c.l.b16 %v262
    %v334 = vunpack.c.l.b16 %v263
    %v335 = vunpack.c.l.b16 %v264
    %v336 = vunpack.c.l.b16 %v265
    %v337 = vunpack.c.l.b16 %v266
    %v338 = vunpack.c.l.b16 %v267
    %v339 = vunpack.c.l.b16 %v268
    %v340 = vunpack.c.l.b16 %v269
    %v341 = vunpack.c.l.b16 %v270
    %v342 = vunpack.c.l.b16 %v271
    %v343 = vunpack.c.l.b16 %v272
    %v344 = vunpack.c.l.b16 %v273
    %v345 = vunpack.c.l.b16 %v274
    %v346 = vunpack.c.l.b16 %v275
    %v347 = vunpack.c.l.b16 %v276
    %v348 = vpack.c.b16 %v317, %v316
    %v349 = vpack.c.b16 %v319, %v318
    %v350 = vpack.c.b16 %v321, %v320
    %v351 = vpack.c.b16 %v323, %v322
    %v352 = vpack.c.b16 %v325, %v324
    %v353 = vpack.c.b16 %v327, %v326
    %v354 = vpack.c.b16 %v329, %v328
    %v355 = vpack.c.b16 %v331, %v330
    %v356 = vpack.c.b16 %v333, %v332
    %v357 = vpack.c.b16 %v335, %v334
    %v358 = vpack.c.b16 %v337, %v336
    %v359 = vpack.c.b16 %v339, %v338
    %v360 = vpack.c.b16 %v341, %v340
    %v361 = vpack.c.b16 %v343, %v342
    %v362 = vpack.c.b16 %v345, %v344
    %v363 = vpack.c.b16 %v347, %v346
    %380 = vmatprep.subr.bf16.mxu0 0
    %381 = vmatpush1.bf16.msra.mxu0 %v348
    %382 = vmatprep.subr.bf16.mxu0 0
    %383 = vmatpush1.bf16.msra.mxu0 %v349
    %384 = vmatprep.subr.bf16.mxu0 0
    %385 = vmatpush1.bf16.msra.mxu0 %v350
    %386 = vmatprep.subr.bf16.mxu0 0
    %387 = vmatpush1.bf16.msra.mxu0 %v351
    %388 = vmatprep.subr.bf16.mxu0 0
    %389 = vmatpush1.bf16.msra.mxu0 %v352
    %390 = vmatprep.subr.bf16.mxu0 0
    %391 = vmatpush1.bf16.msra.mxu0 %v353
    %392 = vmatprep.subr.bf16.mxu0 0
    %393 = vmatpush1.bf16.msra.mxu0 %v354
    %394 = vmatprep.subr.bf16.mxu0 0
    %395 = vmatpush1.bf16.msra.mxu0 %v355
    %396 = vmatprep.subr.bf16.mxu0 0
    %397 = vmatpush1.bf16.msra.mxu0 %v356
    %398 = vmatprep.subr.bf16.mxu0 0
    %399 = vmatpush1.bf16.msra.mxu0 %v357
    %400 = vmatprep.subr.bf16.mxu0 0
    %401 = vmatpush1.bf16.msra.mxu0 %v358
    %402 = vmatprep.subr.bf16.mxu0 0
    %403 = vmatpush1.bf16.msra.mxu0 %v359
    %404 = vmatprep.subr.bf16.mxu0 0
    %405 = vmatpush1.bf16.msra.mxu0 %v360
    %406 = vmatprep.subr.bf16.mxu0 0
    %407 = vmatpush1.bf16.msra.mxu0 %v361
    %408 = vmatprep.subr.bf16.mxu0 0
    %409 = vmatpush1.bf16.msra.mxu0 %v362
    %410 = vmatprep.subr.bf16.mxu0 0
    %411 = vmatpush1.bf16.msra.mxu0 %v363
    %412 = vmatprep.mubr.bf16.mxu0 %v244
    %413 = vmatmul.mubr.bf16.gmra.mrb[0].mxu0 %v243
    %v414 = vpop.f32.mrb[0].mxu0
    %v415 = vadd.f32 %v282, %v414
    %v416 = vpop.f32.mrb[0].mxu0
    %v417 = vpop.f32.mrb[0].mxu0
    %v418 = vpop.f32.mrb[0].mxu0
    %419 = vdwg.mxu0
    %v420 = vld [vmem:[%s9] sm:$0x1]
    %v421 = vld [vmem:[%s10] sm:$0x1]
    %422 = vadd.xlane.f32.xlu0 %v415
    %v423 = vpop.xlane.xlu0 %422
    %v424 = vrcp.pop 128.0
    %v425 = vmul.f32 %v423, %v424
    %v426 = vmul.f32 %v415, %v415
    %427 = vadd.xlane.f32.xlu0 %v426
    %v428 = vpop.xlane.xlu0 %427
    %v429 = vmul.f32 %v428, %v424
    %v430 = vmul.f32 %v425, %v425
    %v431 = vsub.f32 %v429, %v430
    %v432 = vadd.f32 %v431, 1e-05
    %v433 = vrsqrt.pop %v432
    %v434 = vsub.f32 %v415, %v425
    %v435 = vmul.f32 %v434, %v433
    %v437 = vlaneseq
    %v438 = vshrl.u32 %v437, 7
    %v439 = vsub.s32 0, %v438
    %v440 = vrot.slane %v420, %v439
    %v442 = vmul.f32 %v435, %v440
    %v444 = vlaneseq
    %v445 = vshrl.u32 %v444, 7
    %v446 = vsub.s32 0, %v445
    %v447 = vrot.slane %v421, %v446
    %v449 = vadd.f32 %v442, %v447
    %v450 = vmax.f32 %v449, 0.0
    %v451 = vpack.c.bf16 %v450, %v450
    %v452 = vld [vmem:[%s11] sm:$0xf]
    %v453 = vld [vmem:[%s11 + $0x4] sm:$0xf]
    %v454 = vld [vmem:[%s11 + $0x8] sm:$0xf]
    %v455 = vld [vmem:[%s11 + $0xc] sm:$0xf]
    %v456 = vld [vmem:[%s11 + $0x10] sm:$0xf]
    %v457 = vld [vmem:[%s11 + $0x14] sm:$0xf]
    %v458 = vld [vmem:[%s11 + $0x18] sm:$0xf]
    %v459 = vld [vmem:[%s11 + $0x1c] sm:$0xf]
    %v460 = vld [vmem:[%s11 + $0x20] sm:$0xf]
    %v461 = vld [vmem:[%s11 + $0x24] sm:$0xf]
    %v462 = vld [vmem:[%s11 + $0x28] sm:$0xf]
    %v463 = vld [vmem:[%s11 + $0x2c] sm:$0xf]
    %v464 = vld [vmem:[%s11 + $0x30] sm:$0xf]
    %v465 = vld [vmem:[%s11 + $0x34] sm:$0xf]
    %v466 = vld [vmem:[%s11 + $0x38] sm:$0xf]
    %v467 = vld [vmem:[%s11 + $0x3c] sm:$0xf]
    %v468 = vld [vmem:[#allocation2] sm:$0x1]
    %v470 = vlaneseq
    %v471 = vshrl.u32 %v470, 7
    %v472 = vsub.s32 0, %v471
    %v473 = vrot.slane %v468, %v472
    %v491 = vunpack.c.l.b16 %v452
    %v492 = vunpack.c.l.b16 %v453
    %v493 = vunpack.c.l.b16 %v454
    %v494 = vunpack.c.l.b16 %v455
    %v495 = vunpack.c.l.b16 %v456
    %v496 = vunpack.c.l.b16 %v457
    %v497 = vunpack.c.l.b16 %v458
    %v498 = vunpack.c.l.b16 %v459
    %v499 = vunpack.c.l.b16 %v460
    %v500 = vunpack.c.l.b16 %v461
    %v501 = vunpack.c.l.b16 %v462
    %v502 = vunpack.c.l.b16 %v463
    %v503 = vunpack.c.l.b16 %v464
    %v504 = vunpack.c.l.b16 %v465
    %v505 = vunpack.c.l.b16 %v466
    %v506 = vunpack.c.l.b16 %v467
    %v507 = vpack.c.b16 %v492, %v491
    %v508 = vpack.c.b16 %v494, %v493
    %v509 = vpack.c.b16 %v496, %v495
    %v510 = vpack.c.b16 %v498, %v497
    %v511 = vpack.c.b16 %v500, %v499
    %v512 = vpack.c.b16 %v502, %v501
    %v513 = vpack.c.b16 %v504, %v503
    %v514 = vpack.c.b16 %v506, %v505
    %523 = vmatprep.subr.bf16.mxu0 0
    %524 = vmatpush1.bf16.msra.mxu0 %v507
    %525 = vmatprep.subr.bf16.mxu0 0
    %526 = vmatpush1.bf16.msra.mxu0 %v508
    %527 = vmatprep.subr.bf16.mxu0 0
    %528 = vmatpush1.bf16.msra.mxu0 %v509
    %529 = vmatprep.subr.bf16.mxu0 0
    %530 = vmatpush1.bf16.msra.mxu0 %v510
    %531 = vmatprep.subr.bf16.mxu0 0
    %532 = vmatpush1.bf16.msra.mxu0 %v511
    %533 = vmatprep.subr.bf16.mxu0 0
    %534 = vmatpush1.bf16.msra.mxu0 %v512
    %535 = vmatprep.subr.bf16.mxu0 0
    %536 = vmatpush1.bf16.msra.mxu0 %v513
    %537 = vmatprep.subr.bf16.mxu0 0
    %538 = vmatpush1.bf16.msra.mxu0 %v514
    %539 = vmatprep.subr.bf16.mxu0 0
    %540 = vmatpush1.bf16.msra.mxu0 0
    %541 = vmatprep.subr.bf16.mxu0 0
    %542 = vmatpush1.bf16.msra.mxu0 0
    %543 = vmatprep.subr.bf16.mxu0 0
    %544 = vmatpush1.bf16.msra.mxu0 0
    %545 = vmatprep.subr.bf16.mxu0 0
    %546 = vmatpush1.bf16.msra.mxu0 0
    %547 = vmatprep.subr.bf16.mxu0 0
    %548 = vmatpush1.bf16.msra.mxu0 0
    %549 = vmatprep.subr.bf16.mxu0 0
    %550 = vmatpush1.bf16.msra.mxu0 0
    %551 = vmatprep.subr.bf16.mxu0 0
    %552 = vmatpush1.bf16.msra.mxu0 0
    %553 = vmatprep.subr.bf16.mxu0 0
    %554 = vmatpush1.bf16.msra.mxu0 0
    %555 = vmatprep.mubr.bf16.mxu0 0
    %556 = vmatmul.mubr.bf16.gmra.mrb[0].mxu0 %v451
    %v557 = vpop.f32.mrb[0].mxu0
    %v558 = vadd.f32 %v473, %v557
    %v559 = vpop.f32.mrb[0].mxu0
    %v560 = vpop.f32.mrb[0].mxu0
    %v561 = vpop.f32.mrb[0].mxu0
    %562 = vdwg.mxu0
    %vm563 = vcmask 7168
    %564 = vst.msk [vmem:[%s13] sm:$0xff] %vm563, %v558
    // Predicated region
    $region58: #{critic_forward.1} parent=1 // pred_check
      _
    $region59: #{critic_forward.1} parent=1 // pred_check_branch
      %566 = sbr.rel (0) target = $region61
    $region60: #{critic_forward.1} parent=1 // pred_region
      _
    $region61: #{critic_forward.1} parent=1 // pred_fallthru
      _
    // Predicated region
    $region62: #{critic_forward.1} parent=1 // pred_check
      _
    $region63: #{critic_forward.1} parent=1 // pred_check_branch
      %568 = sbr.rel (0) target = $region65
    $region64: #{critic_forward.1} parent=1 // pred_region
      _
    $region65: #{critic_forward.1} parent=1 // pred_fallthru
      _
    %569 = vsyncpa [#allocation4], 1

</llo_original>
